<compile_context>
chip_gen: v6e
topology: v6e:2x2x1
jax: 0.10.0
libtpu: 0.0.40
codegen_flags: <defaults>
</compile_context>

<pallas_src>
import jax
import jax.numpy as jnp
from jax.experimental import pallas as pl
from jax.experimental.pallas import tpu as pltpu


def qry_tower_kernel(x_ref, w1_ref, b1_ref, w2_ref, b2_ref, o_ref):
    # Cast x to the weight (compute) dtype in VMEM -- the VPU has large slack
    # under the DMA, and this keeps the HBM read of x at its native dtype.
    x = x_ref[...].astype(w1_ref.dtype)

    # Linear 1 (MXU, f32 accumulation; K=300 is handled by Mosaic's internal
    # tile masking) + bias + ReLU.
    h = jnp.dot(x, w1_ref[...], preferred_element_type=jnp.float32)
    h = jnp.maximum(h + b1_ref[...], 0.0)        # b1 is (1, H) -> broadcasts

    # Linear 2 (cast activations to the weight dtype for full-rate MXU).
    e = jnp.dot(h.astype(w2_ref.dtype), w2_ref[...],
                preferred_element_type=jnp.float32)
    e = e + b2_ref[...]                          # b2 is (1, D_out) -> broadcasts

    # F.normalize(emb, p=2, dim=-1): x / max(||x||_2, eps), eps = 1e-12.
    # Implemented as e * rsqrt(max(sum(e^2), eps^2)) in f32 -> rsqrt lives on
    # the EUP slot, multiply is a cheap vmul; only the final store narrows.
    sq = jnp.sum(e * e, axis=-1, keepdims=True)
    inv = jax.lax.rsqrt(jnp.maximum(sq, 1e-24))
    o_ref[...] = (e * inv).astype(o_ref.dtype)


def _round_up(n, m):
    return ((n + m - 1) // m) * m


def qry_tower(x, w1, b1, w2, b2, *, tile_m=1024,
              compute_dtype=jnp.bfloat16, out_dtype=jnp.bfloat16):
    """x: [B, D_in]; w1: [D_in, H]; b1: [H]/[1,H]; w2: [H, D_out]; b2: [D_out]/[1,D_out]."""
    B, D_in = x.shape
    assert w1.shape[0] == D_in
    H = w1.shape[1]
    assert w2.shape[0] == H
    D_out = w2.shape[1]

    # --- M-tile selection ----------------------------------------------------
    # Keep the batch grid >= 2 steps for large B so the "parallel" axis shards
    # across both TensorCores on v7x; then never exceed the (8-rounded) batch.
    tile_m = min(tile_m, max(128, _round_up(pl.cdiv(B, 2), 128)))
    tile_m = max(8, min(tile_m, _round_up(B, 8)))
    grid = (pl.cdiv(B, tile_m),)   # partial edge block is masked by Pallas

    # --- dtypes: matmul weights in compute_dtype (bf16 by default), biases and
    # accumulation in f32.  x is passed through untouched (cast in-kernel).
    w1 = jnp.asarray(w1, compute_dtype)
    w2 = jnp.asarray(w2, compute_dtype)
    b1 = jnp.asarray(b1, jnp.float32).reshape(1, H)
    b2 = jnp.asarray(b2, jnp.float32).reshape(1, D_out)

    cost = pl.CostEstimate(
        flops=2 * B * (D_in * H + H * D_out),
        transcendentals=B,  # one rsqrt per row
        bytes_accessed=(x.size * x.dtype.itemsize
                        + (w1.size + w2.size) * jnp.dtype(compute_dtype).itemsize
                        + (b1.size + b2.size) * 4
                        + B * D_out * jnp.dtype(out_dtype).itemsize),
    )

    return pl.pallas_call(
        qry_tower_kernel,
        out_shape=jax.ShapeDtypeStruct((B, D_out), out_dtype),
        grid_spec=pltpu.PrefetchScalarGridSpec(
            num_scalar_prefetch=0,
            grid=grid,
            in_specs=[
                pl.BlockSpec((tile_m, D_in), lambda i: (i, 0)),  # x tile (native dtype)
                pl.BlockSpec((D_in, H), lambda i: (0, 0)),       # W1 (resident)
                pl.BlockSpec((1, H), lambda i: (0, 0)),          # b1
                pl.BlockSpec((H, D_out), lambda i: (0, 0)),      # W2 (resident)
                pl.BlockSpec((1, D_out), lambda i: (0, 0)),      # b2
            ],
            out_specs=pl.BlockSpec((tile_m, D_out), lambda i: (i, 0)),
        ),
        compiler_params=pltpu.CompilerParams(
            # Batch axis is embarrassingly parallel -> shards across the two
            # TensorCores on v7x whenever grid >= 2.
            dimension_semantics=("parallel",),
        ),
        cost_estimate=cost,
    )(x, w1, b1, w2, b2)


def reference(x, w1, b1, w2, b2):
    h = jnp.maximum(x @ w1 + b1, 0.0)
    e = h @ w2 + b2
    n = jnp.sqrt(jnp.sum(e * e, axis=-1, keepdims=True))
    return e / jnp.maximum(n, 1e-12)


if __name__ == "__main__":
    # Module dims: input_dim=300, hidden_dim=256, output_dim=128; small batch.
    B, D_IN, HIDDEN, D_OUT = 8, 300, 256, 128

    key = jax.random.PRNGKey(0)
    kx, k1, kb1, k2, kb2 = jax.random.split(key, 5)

    x = jax.random.normal(kx, (B, D_IN), dtype=jnp.float32)
    # Deterministic synthetic parameters (kaiming-ish scaling).
    w1 = jax.random.normal(k1, (D_IN, HIDDEN), dtype=jnp.float32) / jnp.sqrt(D_IN)
    b1 = jax.random.normal(kb1, (1, HIDDEN), dtype=jnp.float32) * 0.01
    w2 = jax.random.normal(k2, (HIDDEN, D_OUT), dtype=jnp.float32) / jnp.sqrt(HIDDEN)
    b2 = jax.random.normal(kb2, (1, D_OUT), dtype=jnp.float32) * 0.01

    ref = reference(x, w1, b1, w2, b2)

    # Exact-numerics path (f32 compute + f32 output) validates grid / K=300 dot.
    out_f32 = jax.block_until_ready(
        qry_tower(x, w1, b1, w2, b2,
                  compute_dtype=jnp.float32, out_dtype=jnp.float32))
    assert out_f32.shape == (B, D_OUT)
    assert jnp.allclose(out_f32, ref, atol=1e-5, rtol=1e-5), "f32 mismatch vs reference"

    # Partial edge block (B not a multiple of the M tile) -> masked writeback.
    B2 = 5
    out_edge = jax.block_until_ready(
        qry_tower(x[:B2], w1, b1, w2, b2,
                  compute_dtype=jnp.float32, out_dtype=jnp.float32))
    assert out_edge.shape == (B2, D_OUT)
    assert jnp.allclose(out_edge, ref[:B2], atol=1e-5, rtol=1e-5), "edge-block mismatch"

    # Default fast path: f32 x read once, bf16 cast in-kernel, bf16 output.
    out = jax.block_until_ready(qry_tower(x, w1, b1, w2, b2))
    assert out.shape == (B, D_OUT)
    assert out.dtype == jnp.bfloat16
    out32 = out.astype(jnp.float32)
    # bf16 matmul operands + bf16 output -> looser tolerance vs f32 reference.
    assert jnp.allclose(out32, ref, atol=4e-2, rtol=4e-2), "bf16 mismatch vs reference"
    # Rows should be (approximately, up to bf16 rounding of the store) unit-norm.
    assert jnp.allclose(jnp.linalg.norm(out32, axis=-1), 1.0, atol=2e-2)

    print("KERNEL_OK")
</pallas_src>

<mosaic_0001>
module attributes {stable_mosaic.version = 11 : i64} {
  func.func @qry_tower_kernel(%arg0: i32, %arg1: memref<8x300xf32, #tpu.memory_space<vmem>>, %arg2: memref<300x256xf32, #tpu.memory_space<vmem>>, %arg3: memref<1x256xf32, #tpu.memory_space<vmem>>, %arg4: memref<256x128xf32, #tpu.memory_space<vmem>>, %arg5: memref<1x128xf32, #tpu.memory_space<vmem>>, %arg6: memref<8x128xf32, #tpu.memory_space<vmem>>) attributes {dimension_semantics = [#tpu.dimension_semantics<parallel>], iteration_bounds = array<i64: 1>, scalar_prefetch = 0 : i64, scratch_operands = 0 : i64, tpu.core_type = #tpu.core_type<tc>, window_params = [{transform_indices = @transform_0, window_bounds = array<i64: 8, 300>}, {pipeline_mode = #tpu.pipeline_mode<synchronous>, transform_indices = @transform_1, window_bounds = array<i64: 300, 256>}, {pipeline_mode = #tpu.pipeline_mode<synchronous>, transform_indices = @transform_2, window_bounds = array<i64: 1, 256>}, {pipeline_mode = #tpu.pipeline_mode<synchronous>, transform_indices = @transform_3, window_bounds = array<i64: 256, 128>}, {pipeline_mode = #tpu.pipeline_mode<synchronous>, transform_indices = @transform_4, window_bounds = array<i64: 1, 128>}, {transform_indices = @transform_5, window_bounds = array<i64: 8, 128>}]} {
    %c0 = arith.constant 0 : index
    %c0_0 = arith.constant 0 : index
    %0 = vector.load %arg1[%c0, %c0_0] : memref<8x300xf32, #tpu.memory_space<vmem>>, vector<8x300xf32>
    %c0_1 = arith.constant 0 : index
    %c0_2 = arith.constant 0 : index
    %1 = vector.load %arg2[%c0_1, %c0_2] : memref<300x256xf32, #tpu.memory_space<vmem>>, vector<300x256xf32>
    %cst = arith.constant dense<0.000000e+00> : vector<8x256xf32>
    %2 = tpu.matmul %0, %1, %cst {dimension_numbers = #tpu.dot_dimension_numbers<[1], [0], [0], [1], [0, 0, 1, 1], [], []>} : vector<8x300xf32>, vector<300x256xf32>, vector<8x256xf32> -> vector<8x256xf32>
    %c0_3 = arith.constant 0 : index
    %c0_4 = arith.constant 0 : index
    %3 = vector.load %arg3[%c0_3, %c0_4] : memref<1x256xf32, #tpu.memory_space<vmem>>, vector<1x256xf32>
    %4 = vector.broadcast %3 : vector<1x256xf32> to vector<8x256xf32>
    %5 = arith.addf %2, %4 : vector<8x256xf32>
    %cst_5 = arith.constant 0.000000e+00 : f32
    %6 = vector.broadcast %cst_5 : f32 to vector<8x256xf32>
    %7 = arith.maximumf %5, %6 : vector<8x256xf32>
    %c0_6 = arith.constant 0 : index
    %c0_7 = arith.constant 0 : index
    %8 = vector.load %arg4[%c0_6, %c0_7] : memref<256x128xf32, #tpu.memory_space<vmem>>, vector<256x128xf32>
    %cst_8 = arith.constant dense<0.000000e+00> : vector<8x128xf32>
    %9 = tpu.matmul %7, %8, %cst_8 {dimension_numbers = #tpu.dot_dimension_numbers<[1], [0], [0], [1], [0, 0, 1, 1], [], []>} : vector<8x256xf32>, vector<256x128xf32>, vector<8x128xf32> -> vector<8x128xf32>
    %c0_9 = arith.constant 0 : index
    %c0_10 = arith.constant 0 : index
    %10 = vector.load %arg5[%c0_9, %c0_10] : memref<1x128xf32, #tpu.memory_space<vmem>>, vector<1x128xf32>
    %11 = vector.broadcast %10 : vector<1x128xf32> to vector<8x128xf32>
    %12 = arith.addf %9, %11 : vector<8x128xf32>
    %13 = arith.mulf %12, %12 : vector<8x128xf32>
    %cst_11 = arith.constant dense<0.000000e+00> : vector<8xf32>
    %14 = vector.multi_reduction <add>, %13, %cst_11 [1] : vector<8x128xf32> to vector<8xf32>
    %15 = vector.shape_cast %14 : vector<8xf32> to vector<8x1xf32>
    %cst_12 = arith.constant 1.000000e-24 : f32
    %16 = vector.broadcast %cst_12 : f32 to vector<8x1xf32>
    %17 = arith.maximumf %15, %16 : vector<8x1xf32>
    %18 = math.rsqrt %17 : vector<8x1xf32>
    %19 = vector.broadcast %18 : vector<8x1xf32> to vector<8x128xf32>
    %20 = arith.mulf %12, %19 : vector<8x128xf32>
    %c0_13 = arith.constant 0 : index
    %c0_14 = arith.constant 0 : index
    %21 = vector.load %arg6[%c0_13, %c0_14] : memref<8x128xf32, #tpu.memory_space<vmem>>, vector<8x128xf32>
    tpu.vector_store %arg6[%c0_13, %c0_14], %20 {strides = array<i32>} : memref<8x128xf32, #tpu.memory_space<vmem>>, vector<8x128xf32>,
    return
  }
  func.func @transform_0(%arg0: i32) -> (i32, i32) {
    %c0_i32 = arith.constant 0 : i32
    %c0_i32_0 = arith.constant 0 : i32
    return %arg0, %c0_i32 : i32, i32
  }
  func.func @transform_1(%arg0: i32) -> (i32, i32) {
    %c0_i32 = arith.constant 0 : i32
    %c0_i32_0 = arith.constant 0 : i32
    %c0_i32_1 = arith.constant 0 : i32
    return %c0_i32, %c0_i32_0 : i32, i32
  }
  func.func @transform_2(%arg0: i32) -> (i32, i32) {
    %c0_i32 = arith.constant 0 : i32
    %c0_i32_0 = arith.constant 0 : i32
    %c0_i32_1 = arith.constant 0 : i32
    return %c0_i32, %c0_i32_0 : i32, i32
  }
  func.func @transform_3(%arg0: i32) -> (i32, i32) {
    %c0_i32 = arith.constant 0 : i32
    %c0_i32_0 = arith.constant 0 : i32
    %c0_i32_1 = arith.constant 0 : i32
    return %c0_i32, %c0_i32_0 : i32, i32
  }
  func.func @transform_4(%arg0: i32) -> (i32, i32) {
    %c0_i32 = arith.constant 0 : i32
    %c0_i32_0 = arith.constant 0 : i32
    %c0_i32_1 = arith.constant 0 : i32
    return %c0_i32, %c0_i32_0 : i32, i32
  }
  func.func @transform_5(%arg0: i32) -> (i32, i32) {
    %c0_i32 = arith.constant 0 : i32
    %c0_i32_0 = arith.constant 0 : i32
    return %arg0, %c0_i32 : i32, i32
  }
}

</mosaic_0001>

<llo_original>
// kernel: tpu_custom_call.1
$region0: #{tpu_custom_call.1}
  #allocation0 [shape = 'u32[]', space=smem, size = 0x4, offset = 0x4, fixed_abs, tag = 'smem constant byte address 0x4 - core index']
  #allocation1 [shape = 'u32[144,128]{1,0:T(1,128)}', space=vmem, size = 0x12000, scoped, tag = 'internal scratch']
  %s0 = inlined_call_operand.hbm [shape: f32[8,300], index: 0, kind: input, shape index: {}]
  %s1 = inlined_call_operand.hbm [shape: f32[300,256], index: 1, kind: input, shape index: {}]
  %s2 = inlined_call_operand.vmem [shape: f32[1,256], index: 2, kind: input, shape index: {}]
  %s3 = inlined_call_operand.hbm [shape: f32[256,128], index: 3, kind: input, shape index: {}]
  %s4 = inlined_call_operand.vmem [shape: f32[1,128], index: 4, kind: input, shape index: {}]
  %s5 = inlined_call_operand.hbm [shape: f32[8,128], index: 5, kind: output, shape index: {}]
  %s6 = sld [smem:[#allocation0]]
  $region42: #{tpu_custom_call.1} parent=0
    _
  %s8 = ssub.s32 1, %s6
  %s9 = scalar_select 0, %s8, %s6
  $region1: #{tpu_custom_call.1} parent=0
    #allocation2 [shape = 'u8[12288]{0}', space=vmem, size = 0x3000, scoped, tag = 'input window, operand 0, single buffered']
    #allocation3 [shape = 's32[1]{0}', space=sflag, size = 0x4, scoped, tag = 'scoped memory for tpu_custom_call.1']
    #allocation4 [shape = 's32[1]{0}', space=sflag, size = 0x4, scoped, tag = 'scoped memory for tpu_custom_call.1']
    #allocation5 [shape = 'u8[311296]{0}', space=vmem, size = 0x4c000, scoped, tag = 'input window, operand 1, single buffered']
    #allocation6 [shape = 's32[1]{0}', space=sflag, size = 0x4, scoped, tag = 'scoped memory for tpu_custom_call.1']
    #allocation7 [shape = 'u8[131072]{0}', space=vmem, size = 0x20000, scoped, tag = 'input window, operand 3, single buffered']
    #allocation8 [shape = 'u8[4096]{0}', space=vmem, size = 0x1000, scoped, tag = 'output window, operand 0, single buffered']
    %10 = vsyncpa [#allocation3], 0
    %11 = vsyncpa [#allocation6], 0
    %12 = vsyncpa [#allocation4], 0
    // Predicated region
    $region2: #{tpu_custom_call.1} parent=1 // pred_check
      _
    $region3: #{tpu_custom_call.1} parent=1 // pred_check_branch
      %14 = sbr.rel (0) target = $region5
    $region4: #{tpu_custom_call.1} parent=1 // pred_region
      %s16 = ssub.s32 384, 384
      %17 = vsyncadd [#allocation3], %s16
      %s19 = sshll.u32 [#allocation2], 4
      %s20 = int_to_ptr.vmem [resolvable:$true] %s19
      %22 = dma.hbm_to_vmem [thread:$0]  %s0, 384, %s20, [#allocation3]
    $region5: #{tpu_custom_call.1} parent=1 // pred_fallthru
      _
    // Predicated region
    $region6: #{tpu_custom_call.1} parent=1 // pred_check
      _
    $region7: #{tpu_custom_call.1} parent=1 // pred_check_branch
      %24 = sbr.rel (0) target = $region9
    $region8: #{tpu_custom_call.1} parent=1 // pred_region
      %s26 = ssub.s32 9728, 9728
      %27 = vsyncadd [#allocation6], %s26
      %s28 = sshll.u32 [#allocation5], 4
      %s29 = int_to_ptr.vmem [resolvable:$true] %s28
      %34 = dma.hbm_to_vmem [thread:$0]  %s1, 9728, %s29, [#allocation6], 256, 256, 16
    $region9: #{tpu_custom_call.1} parent=1 // pred_fallthru
      _
    // Predicated region
    $region10: #{tpu_custom_call.1} parent=1 // pred_check
      _
    $region11: #{tpu_custom_call.1} parent=1 // pred_check_branch
      %36 = sbr.rel (0) target = $region13
    $region12: #{tpu_custom_call.1} parent=1 // pred_region
      _
    $region13: #{tpu_custom_call.1} parent=1 // pred_fallthru
      _
    // Predicated region
    $region14: #{tpu_custom_call.1} parent=1 // pred_check
      _
    $region15: #{tpu_custom_call.1} parent=1 // pred_check_branch
      %38 = sbr.rel (0) target = $region17
    $region16: #{tpu_custom_call.1} parent=1 // pred_region
      %s40 = ssub.s32 4096, 4096
      %41 = vsyncadd [#allocation6], %s40
      %s42 = sshll.u32 [#allocation7], 4
      %s43 = int_to_ptr.vmem [resolvable:$true] %s42
      %48 = dma.hbm_to_vmem [thread:$0]  %s3, 4096, %s43, [#allocation6], 128, 128, 8
    $region17: #{tpu_custom_call.1} parent=1 // pred_fallthru
      _
    // Predicated region
    $region18: #{tpu_custom_call.1} parent=1 // pred_check
      _
    $region19: #{tpu_custom_call.1} parent=1 // pred_check_branch
      %50 = sbr.rel (0) target = $region21
    $region20: #{tpu_custom_call.1} parent=1 // pred_region
      _
    $region21: #{tpu_custom_call.1} parent=1 // pred_fallthru
      _
    // Predicated region
    $region22: #{tpu_custom_call.1} parent=1 // pred_check
      _
    $region23: #{tpu_custom_call.1} parent=1 // pred_check_branch
      %52 = sbr.rel (0) target = $region25
    $region24: #{tpu_custom_call.1} parent=1 // pred_region
      %53 = dma.done [#allocation3], 384
    $region25: #{tpu_custom_call.1} parent=1 // pred_fallthru
      _
    // Predicated region
    $region26: #{tpu_custom_call.1} parent=1 // pred_check
      _
    $region27: #{tpu_custom_call.1} parent=1 // pred_check_branch
      %55 = sbr.rel (0) target = $region29
    $region28: #{tpu_custom_call.1} parent=1 // pred_region
      %56 = dma.done [#allocation6], 9728
    $region29: #{tpu_custom_call.1} parent=1 // pred_fallthru
      _
    // Predicated region
    $region30: #{tpu_custom_call.1} parent=1 // pred_check
      _
    $region31: #{tpu_custom_call.1} parent=1 // pred_check_branch
      %58 = sbr.rel (0) target = $region33
    $region32: #{tpu_custom_call.1} parent=1 // pred_region
      %59 = dma.done [#allocation6], 4096
    $region33: #{tpu_custom_call.1} parent=1 // pred_fallthru
      _
    %v60 = vld [vmem:[#allocation2] sm:$0xff]
    %v61 = vld [vmem:[#allocation2 + $0x8] sm:$0xff]
    %v62 = vld [vmem:[#allocation2 + $0x10] sm:$0xff]
    %v63 = vld [vmem:[#allocation5] sm:$0xff]
    %v64 = vld [vmem:[#allocation5 + $0x8] sm:$0xff]
    %v65 = vld [vmem:[#allocation5 + $0x10] sm:$0xff]
    %v66 = vld [vmem:[#allocation5 + $0x18] sm:$0xff]
    %v67 = vld [vmem:[#allocation5 + $0x20] sm:$0xff]
    %v68 = vld [vmem:[#allocation5 + $0x28] sm:$0xff]
    %v69 = vld [vmem:[#allocation5 + $0x30] sm:$0xff]
    %v70 = vld [vmem:[#allocation5 + $0x38] sm:$0xff]
    %v71 = vld [vmem:[#allocation5 + $0x40] sm:$0xff]
    %v72 = vld [vmem:[#allocation5 + $0x48] sm:$0xff]
    %v73 = vld [vmem:[#allocation5 + $0x50] sm:$0xff]
    %v74 = vld [vmem:[#allocation5 + $0x58] sm:$0xff]
    %v75 = vld [vmem:[#allocation5 + $0x60] sm:$0xff]
    %v76 = vld [vmem:[#allocation5 + $0x68] sm:$0xff]
    %v77 = vld [vmem:[#allocation5 + $0x70] sm:$0xff]
    %v78 = vld [vmem:[#allocation5 + $0x78] sm:$0xff]
    %v79 = vld [vmem:[#allocation5 + $0x80] sm:$0xff]
    %v80 = vld [vmem:[#allocation5 + $0x88] sm:$0xff]
    %v81 = vld [vmem:[#allocation5 + $0x90] sm:$0xff]
    %v82 = vld [vmem:[#allocation5 + $0x98] sm:$0xff]
    %v83 = vld [vmem:[#allocation5 + $0xa0] sm:$0xff]
    %v84 = vld [vmem:[#allocation5 + $0xa8] sm:$0xff]
    %v85 = vld [vmem:[#allocation5 + $0xb0] sm:$0xff]
    %v86 = vld [vmem:[#allocation5 + $0xb8] sm:$0xff]
    %v87 = vld [vmem:[#allocation5 + $0xc0] sm:$0xff]
    %v88 = vld [vmem:[#allocation5 + $0xc8] sm:$0xff]
    %v89 = vld [vmem:[#allocation5 + $0xd0] sm:$0xff]
    %v90 = vld [vmem:[#allocation5 + $0xd8] sm:$0xff]
    %v91 = vld [vmem:[#allocation5 + $0xe0] sm:$0xff]
    %v92 = vld [vmem:[#allocation5 + $0xe8] sm:$0xff]
    %v93 = vld [vmem:[#allocation5 + $0xf0] sm:$0xff]
    %v94 = vld [vmem:[#allocation5 + $0xf8] sm:$0xff]
    %v95 = vld [vmem:[#allocation5 + $0x100] sm:$0xff]
    %v96 = vld [vmem:[#allocation5 + $0x108] sm:$0xff]
    %v97 = vld [vmem:[#allocation5 + $0x110] sm:$0xff]
    %v98 = vld [vmem:[#allocation5 + $0x118] sm:$0xff]
    %v99 = vld [vmem:[#allocation5 + $0x120] sm:$0xff]
    %v100 = vld [vmem:[#allocation5 + $0x128] sm:$0xff]
    %v101 = vld [vmem:[#allocation5 + $0x130] sm:$0xff]
    %v102 = vld [vmem:[#allocation5 + $0x138] sm:$0xff]
    %v103 = vld [vmem:[#allocation5 + $0x140] sm:$0xff]
    %v104 = vld [vmem:[#allocation5 + $0x148] sm:$0xff]
    %v105 = vld [vmem:[#allocation5 + $0x150] sm:$0xff]
    %v106 = vld [vmem:[#allocation5 + $0x158] sm:$0xff]
    %v107 = vld [vmem:[#allocation5 + $0x160] sm:$0xff]
    %v108 = vld [vmem:[#allocation5 + $0x168] sm:$0xff]
    %v109 = vld [vmem:[#allocation5 + $0x170] sm:$0xff]
    %v110 = vld [vmem:[#allocation5 + $0x178] sm:$0xff]
    %v111 = vld [vmem:[#allocation5 + $0x180] sm:$0xff]
    %v112 = vld [vmem:[#allocation5 + $0x188] sm:$0xff]
    %v113 = vld [vmem:[#allocation5 + $0x190] sm:$0xff]
    %v114 = vld [vmem:[#allocation5 + $0x198] sm:$0xff]
    %v115 = vld [vmem:[#allocation5 + $0x1a0] sm:$0xff]
    %v116 = vld [vmem:[#allocation5 + $0x1a8] sm:$0xff]
    %v117 = vld [vmem:[#allocation5 + $0x1b0] sm:$0xff]
    %v118 = vld [vmem:[#allocation5 + $0x1b8] sm:$0xff]
    %v119 = vld [vmem:[#allocation5 + $0x1c0] sm:$0xff]
    %v120 = vld [vmem:[#allocation5 + $0x1c8] sm:$0xff]
    %v121 = vld [vmem:[#allocation5 + $0x1d0] sm:$0xff]
    %v122 = vld [vmem:[#allocation5 + $0x1d8] sm:$0xff]
    %v123 = vld [vmem:[#allocation5 + $0x1e0] sm:$0xff]
    %v124 = vld [vmem:[#allocation5 + $0x1e8] sm:$0xff]
    %v125 = vld [vmem:[#allocation5 + $0x1f0] sm:$0xff]
    %v126 = vld [vmem:[#allocation5 + $0x1f8] sm:$0xff]
    %v127 = vld [vmem:[#allocation5 + $0x200] sm:$0xff]
    %v128 = vld [vmem:[#allocation5 + $0x208] sm:$0xff]
    %v129 = vld [vmem:[#allocation5 + $0x210] sm:$0xff]
    %v130 = vld [vmem:[#allocation5 + $0x218] sm:$0xff]
    %v131 = vld [vmem:[#allocation5 + $0x220] sm:$0xff]
    %v132 = vld [vmem:[#allocation5 + $0x228] sm:$0xff]
    %v133 = vld [vmem:[#allocation5 + $0x230] sm:$0xff]
    %v134 = vld [vmem:[#allocation5 + $0x238] sm:$0xff]
    %v135 = vld [vmem:[#allocation5 + $0x240] sm:$0xff]
    %v136 = vld [vmem:[#allocation5 + $0x248] sm:$0xff]
    %v137 = vld [vmem:[#allocation5 + $0x250] sm:$0xf]
    %v138 = vld [vmem:[#allocation5 + $0x258] sm:$0xf]
    %v139 = vld [vmem:[%s2] sm:$0x3]
    %v141 = vlaneseq
    %v142 = vshrl.u32 %v141, 7
    %v143 = vsub.s32 0, %v142
    %v144 = vrot.slane %v139, %v143
    %v145 = vlaneseq
    %v146 = vshrl.u32 %v145, 7
    %v147 = vsub.s32 1, %v146
    %v148 = vrot.slane %v139, %v147
    %vm151 = vcmask 359424
    %v153 = vsel %vm151, %v62, 0
    %vm155 = vcmask 1043456
    %v157 = vsel %vm155, %v137, 0
    %v160 = vsel %vm155, %v138, 0
    %162 = vmatprep.subr.mxu0 %v94
    %163 = vmatpush1.msra.mxu0 %v93
    %164 = vmatprep.subr.mxu0 %v92
    %165 = vmatpush1.msra.mxu0 %v91
    %166 = vmatprep.subr.mxu0 %v90
    %167 = vmatpush1.msra.mxu0 %v89
    %168 = vmatprep.subr.mxu0 %v88
    %169 = vmatpush1.msra.mxu0 %v87
    %170 = vmatprep.subr.mxu0 %v86
    %171 = vmatpush1.msra.mxu0 %v85
    %172 = vmatprep.subr.mxu0 %v84
    %173 = vmatpush1.msra.mxu0 %v83
    %174 = vmatprep.subr.mxu0 %v82
    %175 = vmatpush1.msra.mxu0 %v81
    %176 = vmatprep.subr.mxu0 %v80
    %177 = vmatpush1.msra.mxu0 %v79
    %178 = vmatprep.subr.mxu0 %v78
    %179 = vmatpush1.msra.mxu0 %v77
    %180 = vmatprep.subr.mxu0 %v76
    %181 = vmatpush1.msra.mxu0 %v75
    %182 = vmatprep.subr.mxu0 %v74
    %183 = vmatpush1.msra.mxu0 %v73
    %184 = vmatprep.subr.mxu0 %v72
    %185 = vmatpush1.msra.mxu0 %v71
    %186 = vmatprep.subr.mxu0 %v70
    %187 = vmatpush1.msra.mxu0 %v69
    %188 = vmatprep.subr.mxu0 %v68
    %189 = vmatpush1.msra.mxu0 %v67
    %190 = vmatprep.subr.mxu0 %v66
    %191 = vmatpush1.msra.mxu0 %v65
    %192 = vmatprep.subr.mxu0 %v64
    %193 = vmatpush1.msra.mxu0 %v63
    %194 = vmatprep.subr.mxu0 %v126
    %195 = vmatpush2.msra.mxu0 %v125
    %196 = vmatprep.subr.mxu0 %v124
    %197 = vmatpush2.msra.mxu0 %v123
    %198 = vmatprep.subr.mxu0 %v122
    %199 = vmatpush2.msra.mxu0 %v121
    %200 = vmatprep.subr.mxu0 %v120
    %201 = vmatpush2.msra.mxu0 %v119
    %202 = vmatprep.subr.mxu0 %v118
    %203 = vmatpush2.msra.mxu0 %v117
    %204 = vmatprep.subr.mxu0 %v116
    %205 = vmatpush2.msra.mxu0 %v115
    %206 = vmatprep.subr.mxu0 %v114
    %207 = vmatpush2.msra.mxu0 %v113
    %208 = vmatprep.subr.mxu0 %v112
    %209 = vmatpush2.msra.mxu0 %v111
    %210 = vmatprep.subr.mxu0 %v110
    %211 = vmatpush2.msra.mxu0 %v109
    %212 = vmatprep.subr.mxu0 %v108
    %213 = vmatpush2.msra.mxu0 %v107
    %214 = vmatprep.subr.mxu0 %v106
    %215 = vmatpush2.msra.mxu0 %v105
    %216 = vmatprep.subr.mxu0 %v104
    %217 = vmatpush2.msra.mxu0 %v103
    %218 = vmatprep.subr.mxu0 %v102
    %219 = vmatpush2.msra.mxu0 %v101
    %220 = vmatprep.subr.mxu0 %v100
    %221 = vmatpush2.msra.mxu0 %v99
    %222 = vmatprep.subr.mxu0 %v98
    %223 = vmatpush2.msra.mxu0 %v97
    %224 = vmatprep.subr.mxu0 %v96
    %225 = vmatpush2.msra.mxu0 %v95
    %226 = vmatprep.mubr.f32.mxu0 %v61
    %227 = vmatmul.mubr.f32.gmra.mxu0 %v60
    %v228 = vpop.f32.mrf.mxu0
    %v229 = vadd.f32 %v144, %v228
    %v230 = vpop.f32.mrf.mxu0
    %v231 = vadd.f32 %v148, %v230
    %232 = vdwg.mxu0
    %233 = vmatprep.subr.mxu0 0.0
    %234 = vmatpush1.msra.mxu0 0.0
    %235 = vmatprep.subr.mxu0 0.0
    %236 = vmatpush1.msra.mxu0 0.0
    %237 = vmatprep.subr.mxu0 0.0
    %238 = vmatpush1.msra.mxu0 0.0
    %239 = vmatprep.subr.mxu0 0.0
    %240 = vmatpush1.msra.mxu0 0.0
    %241 = vmatprep.subr.mxu0 0.0
    %242 = vmatpush1.msra.mxu0 0.0
    %243 = vmatprep.subr.mxu0 0.0
    %244 = vmatpush1.msra.mxu0 0.0
    %245 = vmatprep.subr.mxu0 0.0
    %246 = vmatpush1.msra.mxu0 0.0
    %247 = vmatprep.subr.mxu0 0.0
    %248 = vmatpush1.msra.mxu0 0.0
    %249 = vmatprep.subr.mxu0 0.0
    %250 = vmatpush1.msra.mxu0 0.0
    %251 = vmatprep.subr.mxu0 0.0
    %252 = vmatpush1.msra.mxu0 0.0
    %253 = vmatprep.subr.mxu0 %v160
    %254 = vmatpush1.msra.mxu0 %v157
    %255 = vmatprep.subr.mxu0 %v136
    %256 = vmatpush1.msra.mxu0 %v135
    %257 = vmatprep.subr.mxu0 %v134
    %258 = vmatpush1.msra.mxu0 %v133
    %259 = vmatprep.subr.mxu0 %v132
    %260 = vmatpush1.msra.mxu0 %v131
    %261 = vmatprep.subr.mxu0 %v130
    %262 = vmatpush1.msra.mxu0 %v129
    %263 = vmatprep.subr.mxu0 %v128
    %264 = vmatpush1.msra.mxu0 %v127
    %265 = vmatprep.subr.mxu0 0.0
    %266 = vmatpush2.msra.mxu0 0.0
    %267 = vmatprep.subr.mxu0 0.0
    %268 = vmatpush2.msra.mxu0 0.0
    %269 = vmatprep.subr.mxu0 0.0
    %270 = vmatpush2.msra.mxu0 0.0
    %271 = vmatprep.subr.mxu0 0.0
    %272 = vmatpush2.msra.mxu0 0.0
    %273 = vmatprep.subr.mxu0 0.0
    %274 = vmatpush2.msra.mxu0 0.0
    %275 = vmatprep.subr.mxu0 0.0
    %276 = vmatpush2.msra.mxu0 0.0
    %277 = vmatprep.subr.mxu0 0.0
    %278 = vmatpush2.msra.mxu0 0.0
    %279 = vmatprep.subr.mxu0 0.0
    %280 = vmatpush2.msra.mxu0 0.0
    %281 = vmatprep.subr.mxu0 0.0
    %282 = vmatpush2.msra.mxu0 0.0
    %283 = vmatprep.subr.mxu0 0.0
    %284 = vmatpush2.msra.mxu0 0.0
    %285 = vmatprep.subr.mxu0 0.0
    %286 = vmatpush2.msra.mxu0 0.0
    %287 = vmatprep.subr.mxu0 0.0
    %288 = vmatpush2.msra.mxu0 0.0
    %289 = vmatprep.subr.mxu0 0.0
    %290 = vmatpush2.msra.mxu0 0.0
    %291 = vmatprep.subr.mxu0 0.0
    %292 = vmatpush2.msra.mxu0 0.0
    %293 = vmatprep.subr.mxu0 0.0
    %294 = vmatpush2.msra.mxu0 0.0
    %295 = vmatprep.subr.mxu0 0.0
    %296 = vmatpush2.msra.mxu0 0.0
    %297 = vmatprep.mubr.f32.mxu0 0.0
    %298 = vmatmul.mubr.f32.gmra.mxu0 %v153
    %v299 = vpop.f32.mrf.mxu0
    %v300 = vadd.f32 %v229, %v299
    %v301 = vpop.f32.mrf.mxu0
    %v302 = vadd.f32 %v231, %v301
    %303 = vdwg.mxu0
    %v304 = vmax.f32 %v300, 0.0
    %v305 = vmax.f32 %v302, 0.0
    %v306 = vld [vmem:[#allocation7] sm:$0xff]
    %v307 = vld [vmem:[#allocation7 + $0x8] sm:$0xff]
    %v308 = vld [vmem:[#allocation7 + $0x10] sm:$0xff]
    %v309 = vld [vmem:[#allocation7 + $0x18] sm:$0xff]
    %v310 = vld [vmem:[#allocation7 + $0x20] sm:$0xff]
    %v311 = vld [vmem:[#allocation7 + $0x28] sm:$0xff]
    %v312 = vld [vmem:[#allocation7 + $0x30] sm:$0xff]
    %v313 = vld [vmem:[#allocation7 + $0x38] sm:$0xff]
    %v314 = vld [vmem:[#allocation7 + $0x40] sm:$0xff]
    %v315 = vld [vmem:[#allocation7 + $0x48] sm:$0xff]
    %v316 = vld [vmem:[#allocation7 + $0x50] sm:$0xff]
    %v317 = vld [vmem:[#allocation7 + $0x58] sm:$0xff]
    %v318 = vld [vmem:[#allocation7 + $0x60] sm:$0xff]
    %v319 = vld [vmem:[#allocation7 + $0x68] sm:$0xff]
    %v320 = vld [vmem:[#allocation7 + $0x70] sm:$0xff]
    %v321 = vld [vmem:[#allocation7 + $0x78] sm:$0xff]
    %v322 = vld [vmem:[#allocation7 + $0x80] sm:$0xff]
    %v323 = vld [vmem:[#allocation7 + $0x88] sm:$0xff]
    %v324 = vld [vmem:[#allocation7 + $0x90] sm:$0xff]
    %v325 = vld [vmem:[#allocation7 + $0x98] sm:$0xff]
    %v326 = vld [vmem:[#allocation7 + $0xa0] sm:$0xff]
    %v327 = vld [vmem:[#allocation7 + $0xa8] sm:$0xff]
    %v328 = vld [vmem:[#allocation7 + $0xb0] sm:$0xff]
    %v329 = vld [vmem:[#allocation7 + $0xb8] sm:$0xff]
    %v330 = vld [vmem:[#allocation7 + $0xc0] sm:$0xff]
    %v331 = vld [vmem:[#allocation7 + $0xc8] sm:$0xff]
    %v332 = vld [vmem:[#allocation7 + $0xd0] sm:$0xff]
    %v333 = vld [vmem:[#allocation7 + $0xd8] sm:$0xff]
    %v334 = vld [vmem:[#allocation7 + $0xe0] sm:$0xff]
    %v335 = vld [vmem:[#allocation7 + $0xe8] sm:$0xff]
    %v336 = vld [vmem:[#allocation7 + $0xf0] sm:$0xff]
    %v337 = vld [vmem:[#allocation7 + $0xf8] sm:$0xff]
    %v338 = vld [vmem:[%s4] sm:$0x1]
    %v340 = vlaneseq
    %v341 = vshrl.u32 %v340, 7
    %v342 = vsub.s32 0, %v341
    %v343 = vrot.slane %v338, %v342
    %345 = vmatprep.subr.mxu0 0.0
    %346 = vmatpush1.msra.mxu0 %v321
    %347 = vmatprep.subr.mxu0 0.0
    %348 = vmatpush1.msra.mxu0 %v320
    %349 = vmatprep.subr.mxu0 0.0
    %350 = vmatpush1.msra.mxu0 %v319
    %351 = vmatprep.subr.mxu0 0.0
    %352 = vmatpush1.msra.mxu0 %v318
    %353 = vmatprep.subr.mxu0 0.0
    %354 = vmatpush1.msra.mxu0 %v317
    %355 = vmatprep.subr.mxu0 0.0
    %356 = vmatpush1.msra.mxu0 %v316
    %357 = vmatprep.subr.mxu0 0.0
    %358 = vmatpush1.msra.mxu0 %v315
    %359 = vmatprep.subr.mxu0 0.0
    %360 = vmatpush1.msra.mxu0 %v314
    %361 = vmatprep.subr.mxu0 0.0
    %362 = vmatpush1.msra.mxu0 %v313
    %363 = vmatprep.subr.mxu0 0.0
    %364 = vmatpush1.msra.mxu0 %v312
    %365 = vmatprep.subr.mxu0 0.0
    %366 = vmatpush1.msra.mxu0 %v311
    %367 = vmatprep.subr.mxu0 0.0
    %368 = vmatpush1.msra.mxu0 %v310
    %369 = vmatprep.subr.mxu0 0.0
    %370 = vmatpush1.msra.mxu0 %v309
    %371 = vmatprep.subr.mxu0 0.0
    %372 = vmatpush1.msra.mxu0 %v308
    %373 = vmatprep.subr.mxu0 0.0
    %374 = vmatpush1.msra.mxu0 %v307
    %375 = vmatprep.subr.mxu0 0.0
    %376 = vmatpush1.msra.mxu0 %v306
    %377 = vmatprep.subr.mxu0 0.0
    %378 = vmatpush2.msra.mxu0 %v337
    %379 = vmatprep.subr.mxu0 0.0
    %380 = vmatpush2.msra.mxu0 %v336
    %381 = vmatprep.subr.mxu0 0.0
    %382 = vmatpush2.msra.mxu0 %v335
    %383 = vmatprep.subr.mxu0 0.0
    %384 = vmatpush2.msra.mxu0 %v334
    %385 = vmatprep.subr.mxu0 0.0
    %386 = vmatpush2.msra.mxu0 %v333
    %387 = vmatprep.subr.mxu0 0.0
    %388 = vmatpush2.msra.mxu0 %v332
    %389 = vmatprep.subr.mxu0 0.0
    %390 = vmatpush2.msra.mxu0 %v331
    %391 = vmatprep.subr.mxu0 0.0
    %392 = vmatpush2.msra.mxu0 %v330
    %393 = vmatprep.subr.mxu0 0.0
    %394 = vmatpush2.msra.mxu0 %v329
    %395 = vmatprep.subr.mxu0 0.0
    %396 = vmatpush2.msra.mxu0 %v328
    %397 = vmatprep.subr.mxu0 0.0
    %398 = vmatpush2.msra.mxu0 %v327
    %399 = vmatprep.subr.mxu0 0.0
    %400 = vmatpush2.msra.mxu0 %v326
    %401 = vmatprep.subr.mxu0 0.0
    %402 = vmatpush2.msra.mxu0 %v325
    %403 = vmatprep.subr.mxu0 0.0
    %404 = vmatpush2.msra.mxu0 %v324
    %405 = vmatprep.subr.mxu0 0.0
    %406 = vmatpush2.msra.mxu0 %v323
    %407 = vmatprep.subr.mxu0 0.0
    %408 = vmatpush2.msra.mxu0 %v322
    %409 = vmatprep.mubr.f32.mxu0 %v305
    %410 = vmatmul.mubr.f32.gmra.mxu0 %v304
    %v411 = vpop.f32.mrf.mxu0
    %v412 = vadd.f32 %v343, %v411
    %v413 = vpop.f32.mrf.mxu0
    %414 = vdwg.mxu0
    %v415 = vmul.f32 %v412, %v412
    %416 = vadd.xlane.f32.xlu0 %v415
    %v417 = vpop.xlane.xlu0 %416
    %v418 = vmax.f32 %v417, 1e-24
    %v419 = vrsqrt.pop %v418
    %v420 = vmul.f32 %v412, %v419
    %421 = vst [vmem:[#allocation8] sm:$0xff] %v420
    // Predicated region
    $region34: #{tpu_custom_call.1} parent=1 // pred_check
      _
    $region35: #{tpu_custom_call.1} parent=1 // pred_check_branch
      %423 = sbr.rel (0) target = $region37
    $region36: #{tpu_custom_call.1} parent=1 // pred_region
      %s425 = ssub.s32 128, 128
      %426 = vsyncadd [#allocation4], %s425
      %s428 = sshll.u32 [#allocation8], 4
      %s429 = int_to_ptr.vmem [resolvable:$true] %s428
      %431 = dma.vmem_to_hbm [thread:$0]  %s429, 128, %s5, [#allocation4]
    $region37: #{tpu_custom_call.1} parent=1 // pred_fallthru
      _
    // Predicated region
    $region38: #{tpu_custom_call.1} parent=1 // pred_check
      _
    $region39: #{tpu_custom_call.1} parent=1 // pred_check_branch
      %433 = sbr.rel (0) target = $region41
    $region40: #{tpu_custom_call.1} parent=1 // pred_region
      %434 = dma.done [#allocation4], 128
    $region41: #{tpu_custom_call.1} parent=1 // pred_fallthru
      _
    %435 = vsyncpa [#allocation3], 1
    %436 = vsyncpa [#allocation6], 1
    %437 = vsyncpa [#allocation4], 1

</llo_original>
